<compile_context>
chip_gen: v5e
topology: v5e:2x2
jax: 0.10.0
libtpu: 0.0.40
codegen_flags: <defaults>
</compile_context>

<pallas_src>
import jax
import jax.numpy as jnp
from jax.experimental import pallas as pl
from jax.experimental.pallas import tpu as pltpu


def _round_up(x, m):
    return ((x + m - 1) // m) * m


# --------------------------- Kernel 1: layers 1-3 (small, runs once) ---------------------------

def _hidden_kernel(z_ref, w1_ref, b1_ref, w2_ref, b2_ref, w3_ref, b3_ref, h_ref):
    h = jnp.dot(z_ref[...], w1_ref[...], preferred_element_type=jnp.float32) + b1_ref[...]
    h = jnp.maximum(h, 0.0)
    h = jnp.dot(h, w2_ref[...], preferred_element_type=jnp.float32) + b2_ref[...]
    h = jnp.maximum(h, 0.0)
    h = jnp.dot(h, w3_ref[...], preferred_element_type=jnp.float32) + b3_ref[...]
    h_ref[...] = jnp.maximum(h, 0.0)


# --------------------------- Kernel 2: layer 4 (dominant), tiled over N ------------------------

def _output_kernel(h_ref, w4_ref, b4_ref, o_ref):
    o = jnp.dot(h_ref[...], w4_ref[...], preferred_element_type=jnp.float32) + b4_ref[...]
    o_ref[...] = jnp.tanh(o)


# --------------------------- Param prep (padding done once, off the hot path) ------------------

def init_params(key, z_dim, ngf, n_channel, image_size):
    """Deterministic synthetic init. Weights stored pre-transposed as (in, out); biases as (1, out)."""
    out_dim = n_channel * image_size * image_size
    dims = [(z_dim, ngf), (ngf, ngf), (ngf, ngf), (ngf, out_dim)]
    params = {}
    for i, (din, dout) in enumerate(dims, start=1):
        key, kw, kb = jax.random.split(key, 3)
        bound = 1.0 / jnp.sqrt(jnp.float32(din))
        params[f"w{i}"] = jax.random.uniform(kw, (din, dout), jnp.float32, -bound, bound)
        params[f"b{i}"] = jax.random.uniform(kb, (1, dout), jnp.float32, -bound, bound)
    return params


def prepare_params(params, *, z_dim, ngf, n_channel, image_size, tn_target=2048):
    """Zero-pad weights to MXU/lane-friendly shapes and pick the output tile size. Done once."""
    out_dim = n_channel * image_size * image_size
    zp = _round_up(z_dim, 128)
    gp = _round_up(ngf, 128)
    tn = min(tn_target, _round_up(out_dim, 128))
    op = _round_up(out_dim, tn)

    def pad2(a, rows, cols):
        return jnp.pad(a, ((0, rows - a.shape[0]), (0, cols - a.shape[1])))

    pparams = {
        "w1": pad2(params["w1"], zp, gp), "b1": pad2(params["b1"], 1, gp),
        "w2": pad2(params["w2"], gp, gp), "b2": pad2(params["b2"], 1, gp),
        "w3": pad2(params["w3"], gp, gp), "b3": pad2(params["b3"], 1, gp),
        "w4": pad2(params["w4"], gp, op), "b4": pad2(params["b4"], 1, op),
    }
    meta = {"z_dim": z_dim, "ngf": ngf, "out_dim": out_dim,
            "zp": zp, "gp": gp, "op": op, "tn": tn}
    return pparams, meta


# --------------------------- Forward ------------------------------------------------------------

def generator_forward(z, pparams, meta, *, n_channel, image_size):
    """z: (B, z_dim) float32. Returns (B, n_channel, image_size, image_size)."""
    B, z_dim = z.shape
    zp, gp, op, tn = meta["zp"], meta["gp"], meta["op"], meta["tn"]
    out_dim = meta["out_dim"]

    Bp = _round_up(B, 8)
    z_p = jnp.pad(z, ((0, Bp - B), (0, zp - z_dim)))

    # ---- layers 1-3: tiny slabs, single invocation, everything whole in VMEM ----
    hidden_cost = pl.CostEstimate(
        flops=2 * Bp * (zp * gp + 2 * gp * gp),
        transcendentals=0,
        bytes_accessed=4 * (Bp * zp + zp * gp + 2 * gp * gp + 3 * gp + Bp * gp),
    )
    h3 = pl.pallas_call(
        _hidden_kernel,
        out_shape=jax.ShapeDtypeStruct((Bp, gp), jnp.float32),
        cost_estimate=hidden_cost,
    )(z_p, pparams["w1"], pparams["b1"],
      pparams["w2"], pparams["b2"],
      pparams["w3"], pparams["b3"])

    # ---- layer 4: tile w4 / bias / output over N, parallel grid axis (megacore on v7x) ----
    n_tiles = op // tn
    tile_bytes = 4 * (gp * tn + Bp * tn + tn)          # w4 tile + out tile + b4 tile
    vmem_limit = min(max(2 * tile_bytes + 4 * Bp * gp + (8 << 20), 32 << 20), 48 << 20)

    out_cost = pl.CostEstimate(
        flops=2 * Bp * gp * op,
        transcendentals=Bp * op,                        # tanh
        bytes_accessed=4 * (Bp * gp + gp * op + op + Bp * op),
    )
    out_flat = pl.pallas_call(
        _output_kernel,
        out_shape=jax.ShapeDtypeStruct((Bp, op), jnp.float32),
        grid=(n_tiles,),
        in_specs=[
            pl.BlockSpec((Bp, gp), lambda j: (0, 0)),   # h3 resident across N tiles
            pl.BlockSpec((gp, tn), lambda j: (0, j)),   # stream w4 column tiles
            pl.BlockSpec((1, tn), lambda j: (0, j)),    # stream bias tiles
        ],
        out_specs=pl.BlockSpec((Bp, tn), lambda j: (0, j)),
        compiler_params=pltpu.CompilerParams(
            dimension_semantics=("parallel",),
            vmem_limit_bytes=int(vmem_limit),
        ),
        cost_estimate=out_cost,
    )(h3, pparams["w4"], pparams["b4"])

    # Strip padding; PyTorch: output.view(B, n_channel, image_size, image_size) (row-major).
    out = out_flat[:B, :out_dim]
    return out.reshape(B, n_channel, image_size, image_size)


# --------------------------- Reference & test ----------------------------------------------------

def reference_forward(z, params, *, n_channel, image_size):
    h = jnp.maximum(z @ params["w1"] + params["b1"], 0.0)
    h = jnp.maximum(h @ params["w2"] + params["b2"], 0.0)
    h = jnp.maximum(h @ params["w3"] + params["b3"], 0.0)
    out = jnp.tanh(h @ params["w4"] + params["b4"])
    return out.reshape(z.shape[0], n_channel, image_size, image_size)


if __name__ == "__main__":
    # Small, module-consistent config.
    batch = 2
    z_dim = 32
    ngf = 64
    n_channel = 4
    image_size = 16

    key = jax.random.PRNGKey(0)
    key, kz = jax.random.split(key)
    z = jax.random.normal(kz, (batch, z_dim), jnp.float32)

    params = init_params(key, z_dim, ngf, n_channel, image_size)
    pparams, meta = prepare_params(params, z_dim=z_dim, ngf=ngf,
                                   n_channel=n_channel, image_size=image_size)

    out = generator_forward(z, pparams, meta, n_channel=n_channel, image_size=image_size)
    out = jax.block_until_ready(out)

    ref = reference_forward(z, params, n_channel=n_channel, image_size=image_size)
    assert out.shape == (batch, n_channel, image_size, image_size)
    assert jnp.allclose(out, ref, atol=1e-5, rtol=1e-5)

    print("KERNEL_OK")
</pallas_src>

<mosaic_0001>
module attributes {stable_mosaic.version = 11 : i64} {
  func.func @_hidden_kernel(%arg0: memref<8x128xf32, #tpu.memory_space<vmem>>, %arg1: memref<128x128xf32, #tpu.memory_space<vmem>>, %arg2: memref<1x128xf32, #tpu.memory_space<vmem>>, %arg3: memref<128x128xf32, #tpu.memory_space<vmem>>, %arg4: memref<1x128xf32, #tpu.memory_space<vmem>>, %arg5: memref<128x128xf32, #tpu.memory_space<vmem>>, %arg6: memref<1x128xf32, #tpu.memory_space<vmem>>, %arg7: memref<8x128xf32, #tpu.memory_space<vmem>>) attributes {dimension_semantics = [], scalar_prefetch = 0 : i64, scratch_operands = 0 : i64, tpu.core_type = #tpu.core_type<tc>} {
    %c0 = arith.constant 0 : index
    %c0_0 = arith.constant 0 : index
    %0 = vector.load %arg0[%c0, %c0_0] : memref<8x128xf32, #tpu.memory_space<vmem>>, vector<8x128xf32>
    %c0_1 = arith.constant 0 : index
    %c0_2 = arith.constant 0 : index
    %1 = vector.load %arg1[%c0_1, %c0_2] : memref<128x128xf32, #tpu.memory_space<vmem>>, vector<128x128xf32>
    %cst = arith.constant dense<0.000000e+00> : vector<8x128xf32>
    %2 = tpu.matmul %0, %1, %cst {dimension_numbers = #tpu.dot_dimension_numbers<[1], [0], [0], [1], [0, 0, 1, 1], [], []>} : vector<8x128xf32>, vector<128x128xf32>, vector<8x128xf32> -> vector<8x128xf32>
    %c0_3 = arith.constant 0 : index
    %c0_4 = arith.constant 0 : index
    %3 = vector.load %arg2[%c0_3, %c0_4] : memref<1x128xf32, #tpu.memory_space<vmem>>, vector<1x128xf32>
    %4 = vector.broadcast %3 : vector<1x128xf32> to vector<8x128xf32>
    %5 = arith.addf %2, %4 : vector<8x128xf32>
    %cst_5 = arith.constant 0.000000e+00 : f32
    %6 = vector.broadcast %cst_5 : f32 to vector<8x128xf32>
    %7 = arith.maximumf %5, %6 : vector<8x128xf32>
    %c0_6 = arith.constant 0 : index
    %c0_7 = arith.constant 0 : index
    %8 = vector.load %arg3[%c0_6, %c0_7] : memref<128x128xf32, #tpu.memory_space<vmem>>, vector<128x128xf32>
    %cst_8 = arith.constant dense<0.000000e+00> : vector<8x128xf32>
    %9 = tpu.matmul %7, %8, %cst_8 {dimension_numbers = #tpu.dot_dimension_numbers<[1], [0], [0], [1], [0, 0, 1, 1], [], []>} : vector<8x128xf32>, vector<128x128xf32>, vector<8x128xf32> -> vector<8x128xf32>
    %c0_9 = arith.constant 0 : index
    %c0_10 = arith.constant 0 : index
    %10 = vector.load %arg4[%c0_9, %c0_10] : memref<1x128xf32, #tpu.memory_space<vmem>>, vector<1x128xf32>
    %11 = vector.broadcast %10 : vector<1x128xf32> to vector<8x128xf32>
    %12 = arith.addf %9, %11 : vector<8x128xf32>
    %cst_11 = arith.constant 0.000000e+00 : f32
    %13 = vector.broadcast %cst_11 : f32 to vector<8x128xf32>
    %14 = arith.maximumf %12, %13 : vector<8x128xf32>
    %c0_12 = arith.constant 0 : index
    %c0_13 = arith.constant 0 : index
    %15 = vector.load %arg5[%c0_12, %c0_13] : memref<128x128xf32, #tpu.memory_space<vmem>>, vector<128x128xf32>
    %cst_14 = arith.constant dense<0.000000e+00> : vector<8x128xf32>
    %16 = tpu.matmul %14, %15, %cst_14 {dimension_numbers = #tpu.dot_dimension_numbers<[1], [0], [0], [1], [0, 0, 1, 1], [], []>} : vector<8x128xf32>, vector<128x128xf32>, vector<8x128xf32> -> vector<8x128xf32>
    %c0_15 = arith.constant 0 : index
    %c0_16 = arith.constant 0 : index
    %17 = vector.load %arg6[%c0_15, %c0_16] : memref<1x128xf32, #tpu.memory_space<vmem>>, vector<1x128xf32>
    %18 = vector.broadcast %17 : vector<1x128xf32> to vector<8x128xf32>
    %19 = arith.addf %16, %18 : vector<8x128xf32>
    %cst_17 = arith.constant 0.000000e+00 : f32
    %20 = vector.broadcast %cst_17 : f32 to vector<8x128xf32>
    %21 = arith.maximumf %19, %20 : vector<8x128xf32>
    %c0_18 = arith.constant 0 : index
    %c0_19 = arith.constant 0 : index
    %22 = vector.load %arg7[%c0_18, %c0_19] : memref<8x128xf32, #tpu.memory_space<vmem>>, vector<8x128xf32>
    tpu.vector_store %arg7[%c0_18, %c0_19], %21 {strides = array<i32>} : memref<8x128xf32, #tpu.memory_space<vmem>>, vector<8x128xf32>,
    return
  }
}

</mosaic_0001>

<llo_original>
// kernel: tpu_custom_call.1
$region0: #{tpu_custom_call.1}
  #allocation0 [shape = 'u32[]', space=smem, size = 0x4, offset = 0x4, fixed_abs, tag = 'smem constant byte address 0x4 - core index']
  #allocation1 [shape = 'u32[72,128]{1,0:T(1,128)}', space=vmem, size = 0x9000, scoped, tag = 'internal scratch']
  %s0 = inlined_call_operand.hbm [shape: f32[8,128], index: 0, kind: input, shape index: {}]
  %s1 = inlined_call_operand.hbm [shape: f32[128,128], index: 1, kind: input, shape index: {}]
  %s2 = inlined_call_operand.vmem [shape: f32[1,128], index: 2, kind: input, shape index: {}]
  %s3 = inlined_call_operand.hbm [shape: f32[128,128], index: 3, kind: input, shape index: {}]
  %s4 = inlined_call_operand.vmem [shape: f32[1,128], index: 4, kind: input, shape index: {}]
  %s5 = inlined_call_operand.hbm [shape: f32[128,128], index: 5, kind: input, shape index: {}]
  %s6 = inlined_call_operand.vmem [shape: f32[1,128], index: 6, kind: input, shape index: {}]
  %s7 = inlined_call_operand.hbm [shape: f32[8,128], index: 7, kind: output, shape index: {}]
  %s8 = sld [smem:[#allocation0]]
  $region54: #{tpu_custom_call.1} parent=0
    _
  %s10 = ssub.s32 1, %s8
  %s11 = scalar_select 0, %s10, %s8
  $region1: #{tpu_custom_call.1} parent=0
    #allocation2 [shape = 'u8[4096]{0}', space=vmem, size = 0x1000, scoped, tag = 'input window, operand 0, single buffered']
    #allocation3 [shape = 's32[1]{0}', space=sflag, size = 0x4, scoped, tag = 'scoped memory for tpu_custom_call.1']
    #allocation4 [shape = 's32[1]{0}', space=sflag, size = 0x4, scoped, tag = 'scoped memory for tpu_custom_call.1']
    #allocation5 [shape = 'u8[65536]{0}', space=vmem, size = 0x10000, scoped, tag = 'input window, operand 1, single buffered']
    #allocation6 [shape = 's32[1]{0}', space=sflag, size = 0x4, scoped, tag = 'scoped memory for tpu_custom_call.1']
    #allocation7 [shape = 'u8[65536]{0}', space=vmem, size = 0x10000, scoped, tag = 'input window, operand 3, single buffered']
    #allocation8 [shape = 'u8[65536]{0}', space=vmem, size = 0x10000, scoped, tag = 'input window, operand 5, single buffered']
    #allocation9 [shape = 's32[1]{0}', space=sflag, size = 0x4, scoped, tag = 'scoped memory for tpu_custom_call.1']
    #allocation10 [shape = 'u8[4096]{0}', space=vmem, size = 0x1000, scoped, tag = 'output window, operand 0, single buffered']
    %12 = vsyncpa [#allocation3], 0
    %13 = vsyncpa [#allocation6], 0
    %14 = vsyncpa [#allocation9], 0
    %15 = vsyncpa [#allocation4], 0
    // Predicated region
    $region2: #{tpu_custom_call.1} parent=1 // pred_check
      _
    $region3: #{tpu_custom_call.1} parent=1 // pred_check_branch
      %17 = sbr.rel (0) target = $region5
    $region4: #{tpu_custom_call.1} parent=1 // pred_region
      %19 = vsyncadd [#allocation3], 0
      %s21 = sshll.u32 %s0, 4
      %s22 = int_to_ptr.hbm [resolvable:$true] %s21
      %s23 = sshll.u32 [#allocation2], 4
      %s24 = int_to_ptr.vmem [resolvable:$true] %s23
      %26 = dma.hbm_to_vmem [thread:$0]  %s22, 128, %s24, [#allocation3]
    $region5: #{tpu_custom_call.1} parent=1 // pred_fallthru
      _
    // Predicated region
    $region6: #{tpu_custom_call.1} parent=1 // pred_check
      _
    $region7: #{tpu_custom_call.1} parent=1 // pred_check_branch
      %28 = sbr.rel (0) target = $region9
    $region8: #{tpu_custom_call.1} parent=1 // pred_region
      %30 = vsyncadd [#allocation6], 0
      %s31 = sshll.u32 %s1, 4
      %s32 = int_to_ptr.hbm [resolvable:$true] %s31
      %s33 = sshll.u32 [#allocation5], 4
      %s34 = int_to_ptr.vmem [resolvable:$true] %s33
      %39 = dma.hbm_to_vmem [thread:$0]  %s32, 2048, %s34, [#allocation6], 128, 128, 8
    $region9: #{tpu_custom_call.1} parent=1 // pred_fallthru
      _
    // Predicated region
    $region10: #{tpu_custom_call.1} parent=1 // pred_check
      _
    $region11: #{tpu_custom_call.1} parent=1 // pred_check_branch
      %41 = sbr.rel (0) target = $region13
    $region12: #{tpu_custom_call.1} parent=1 // pred_region
      _
    $region13: #{tpu_custom_call.1} parent=1 // pred_fallthru
      _
    // Predicated region
    $region14: #{tpu_custom_call.1} parent=1 // pred_check
      _
    $region15: #{tpu_custom_call.1} parent=1 // pred_check_branch
      %43 = sbr.rel (0) target = $region17
    $region16: #{tpu_custom_call.1} parent=1 // pred_region
      %45 = vsyncadd [#allocation6], 0
      %s46 = sshll.u32 %s3, 4
      %s47 = int_to_ptr.hbm [resolvable:$true] %s46
      %s48 = sshll.u32 [#allocation7], 4
      %s49 = int_to_ptr.vmem [resolvable:$true] %s48
      %54 = dma.hbm_to_vmem [thread:$0]  %s47, 2048, %s49, [#allocation6], 128, 128, 8
    $region17: #{tpu_custom_call.1} parent=1 // pred_fallthru
      _
    // Predicated region
    $region18: #{tpu_custom_call.1} parent=1 // pred_check
      _
    $region19: #{tpu_custom_call.1} parent=1 // pred_check_branch
      %56 = sbr.rel (0) target = $region21
    $region20: #{tpu_custom_call.1} parent=1 // pred_region
      _
    $region21: #{tpu_custom_call.1} parent=1 // pred_fallthru
      _
    // Predicated region
    $region22: #{tpu_custom_call.1} parent=1 // pred_check
      _
    $region23: #{tpu_custom_call.1} parent=1 // pred_check_branch
      %58 = sbr.rel (0) target = $region25
    $region24: #{tpu_custom_call.1} parent=1 // pred_region
      %60 = vsyncadd [#allocation9], 0
      %s61 = sshll.u32 %s5, 4
      %s62 = int_to_ptr.hbm [resolvable:$true] %s61
      %s63 = sshll.u32 [#allocation8], 4
      %s64 = int_to_ptr.vmem [resolvable:$true] %s63
      %69 = dma.hbm_to_vmem [thread:$0]  %s62, 2048, %s64, [#allocation9], 128, 128, 8
    $region25: #{tpu_custom_call.1} parent=1 // pred_fallthru
      _
    // Predicated region
    $region26: #{tpu_custom_call.1} parent=1 // pred_check
      _
    $region27: #{tpu_custom_call.1} parent=1 // pred_check_branch
      %71 = sbr.rel (0) target = $region29
    $region28: #{tpu_custom_call.1} parent=1 // pred_region
      _
    $region29: #{tpu_custom_call.1} parent=1 // pred_fallthru
      _
    // Predicated region
    $region30: #{tpu_custom_call.1} parent=1 // pred_check
      _
    $region31: #{tpu_custom_call.1} parent=1 // pred_check_branch
      %73 = sbr.rel (0) target = $region33
    $region32: #{tpu_custom_call.1} parent=1 // pred_region
      %75 = dma.done [#allocation3], 128
    $region33: #{tpu_custom_call.1} parent=1 // pred_fallthru
      _
    // Predicated region
    $region34: #{tpu_custom_call.1} parent=1 // pred_check
      _
    $region35: #{tpu_custom_call.1} parent=1 // pred_check_branch
      %77 = sbr.rel (0) target = $region37
    $region36: #{tpu_custom_call.1} parent=1 // pred_region
      %79 = dma.done [#allocation6], 2048
    $region37: #{tpu_custom_call.1} parent=1 // pred_fallthru
      _
    // Predicated region
    $region38: #{tpu_custom_call.1} parent=1 // pred_check
      _
    $region39: #{tpu_custom_call.1} parent=1 // pred_check_branch
      %81 = sbr.rel (0) target = $region41
    $region40: #{tpu_custom_call.1} parent=1 // pred_region
      %83 = dma.done [#allocation6], 2048
    $region41: #{tpu_custom_call.1} parent=1 // pred_fallthru
      _
    // Predicated region
    $region42: #{tpu_custom_call.1} parent=1 // pred_check
      _
    $region43: #{tpu_custom_call.1} parent=1 // pred_check_branch
      %85 = sbr.rel (0) target = $region45
    $region44: #{tpu_custom_call.1} parent=1 // pred_region
      %87 = dma.done [#allocation9], 2048
    $region45: #{tpu_custom_call.1} parent=1 // pred_fallthru
      _
    %v88 = vld [vmem:[#allocation2] sm:$0xff]
    %v89 = vld [vmem:[#allocation5] sm:$0xff]
    %v90 = vld [vmem:[#allocation5 + $0x8] sm:$0xff]
    %v91 = vld [vmem:[#allocation5 + $0x10] sm:$0xff]
    %v92 = vld [vmem:[#allocation5 + $0x18] sm:$0xff]
    %v93 = vld [vmem:[#allocation5 + $0x20] sm:$0xff]
    %v94 = vld [vmem:[#allocation5 + $0x28] sm:$0xff]
    %v95 = vld [vmem:[#allocation5 + $0x30] sm:$0xff]
    %v96 = vld [vmem:[#allocation5 + $0x38] sm:$0xff]
    %v97 = vld [vmem:[#allocation5 + $0x40] sm:$0xff]
    %v98 = vld [vmem:[#allocation5 + $0x48] sm:$0xff]
    %v99 = vld [vmem:[#allocation5 + $0x50] sm:$0xff]
    %v100 = vld [vmem:[#allocation5 + $0x58] sm:$0xff]
    %v101 = vld [vmem:[#allocation5 + $0x60] sm:$0xff]
    %v102 = vld [vmem:[#allocation5 + $0x68] sm:$0xff]
    %v103 = vld [vmem:[#allocation5 + $0x70] sm:$0xff]
    %v104 = vld [vmem:[#allocation5 + $0x78] sm:$0xff]
    %v105 = vld [vmem:[%s2] sm:$0x1]
    %v107 = vperm.slane %v105, 0
    %109 = vmatpush.msra.mxu0 %v104
    %110 = vmatpush.msra.mxu0 %v103
    %111 = vmatpush.msra.mxu0 %v102
    %112 = vmatpush.msra.mxu0 %v101
    %113 = vmatpush.msra.mxu0 %v100
    %114 = vmatpush.msra.mxu0 %v99
    %115 = vmatpush.msra.mxu0 %v98
    %116 = vmatpush.msra.mxu0 %v97
    %117 = vmatpush.msra.mxu0 %v96
    %118 = vmatpush.msra.mxu0 %v95
    %119 = vmatpush.msra.mxu0 %v94
    %120 = vmatpush.msra.mxu0 %v93
    %121 = vmatpush.msra.mxu0 %v92
    %122 = vmatpush.msra.mxu0 %v91
    %123 = vmatpush.msra.mxu0 %v90
    %124 = vmatpush.msra.mxu0 %v89
    %125 = vmatmul.f32.gmra.mxu0 %v88
    %v126 = vpop.f32.mrf.mxu0
    %v127 = vadd.f32 %v107, %v126
    %128 = vdwg.mxu0
    %v129 = vmax.f32 %v127, 0.0
    %v130 = vld [vmem:[#allocation7] sm:$0xff]
    %v131 = vld [vmem:[#allocation7 + $0x8] sm:$0xff]
    %v132 = vld [vmem:[#allocation7 + $0x10] sm:$0xff]
    %v133 = vld [vmem:[#allocation7 + $0x18] sm:$0xff]
    %v134 = vld [vmem:[#allocation7 + $0x20] sm:$0xff]
    %v135 = vld [vmem:[#allocation7 + $0x28] sm:$0xff]
    %v136 = vld [vmem:[#allocation7 + $0x30] sm:$0xff]
    %v137 = vld [vmem:[#allocation7 + $0x38] sm:$0xff]
    %v138 = vld [vmem:[#allocation7 + $0x40] sm:$0xff]
    %v139 = vld [vmem:[#allocation7 + $0x48] sm:$0xff]
    %v140 = vld [vmem:[#allocation7 + $0x50] sm:$0xff]
    %v141 = vld [vmem:[#allocation7 + $0x58] sm:$0xff]
    %v142 = vld [vmem:[#allocation7 + $0x60] sm:$0xff]
    %v143 = vld [vmem:[#allocation7 + $0x68] sm:$0xff]
    %v144 = vld [vmem:[#allocation7 + $0x70] sm:$0xff]
    %v145 = vld [vmem:[#allocation7 + $0x78] sm:$0xff]
    %v146 = vld [vmem:[%s4] sm:$0x1]
    %v148 = vperm.slane %v146, 0
    %150 = vmatpush.msra.mxu0 %v145
    %151 = vmatpush.msra.mxu0 %v144
    %152 = vmatpush.msra.mxu0 %v143
    %153 = vmatpush.msra.mxu0 %v142
    %154 = vmatpush.msra.mxu0 %v141
    %155 = vmatpush.msra.mxu0 %v140
    %156 = vmatpush.msra.mxu0 %v139
    %157 = vmatpush.msra.mxu0 %v138
    %158 = vmatpush.msra.mxu0 %v137
    %159 = vmatpush.msra.mxu0 %v136
    %160 = vmatpush.msra.mxu0 %v135
    %161 = vmatpush.msra.mxu0 %v134
    %162 = vmatpush.msra.mxu0 %v133
    %163 = vmatpush.msra.mxu0 %v132
    %164 = vmatpush.msra.mxu0 %v131
    %165 = vmatpush.msra.mxu0 %v130
    %166 = vmatmul.f32.gmra.mxu0 %v129
    %v167 = vpop.f32.mrf.mxu0
    %v168 = vadd.f32 %v148, %v167
    %169 = vdwg.mxu0
    %v170 = vmax.f32 %v168, 0.0
    %v171 = vld [vmem:[#allocation8] sm:$0xff]
    %v172 = vld [vmem:[#allocation8 + $0x8] sm:$0xff]
    %v173 = vld [vmem:[#allocation8 + $0x10] sm:$0xff]
    %v174 = vld [vmem:[#allocation8 + $0x18] sm:$0xff]
    %v175 = vld [vmem:[#allocation8 + $0x20] sm:$0xff]
    %v176 = vld [vmem:[#allocation8 + $0x28] sm:$0xff]
    %v177 = vld [vmem:[#allocation8 + $0x30] sm:$0xff]
    %v178 = vld [vmem:[#allocation8 + $0x38] sm:$0xff]
    %v179 = vld [vmem:[#allocation8 + $0x40] sm:$0xff]
    %v180 = vld [vmem:[#allocation8 + $0x48] sm:$0xff]
    %v181 = vld [vmem:[#allocation8 + $0x50] sm:$0xff]
    %v182 = vld [vmem:[#allocation8 + $0x58] sm:$0xff]
    %v183 = vld [vmem:[#allocation8 + $0x60] sm:$0xff]
    %v184 = vld [vmem:[#allocation8 + $0x68] sm:$0xff]
    %v185 = vld [vmem:[#allocation8 + $0x70] sm:$0xff]
    %v186 = vld [vmem:[#allocation8 + $0x78] sm:$0xff]
    %v187 = vld [vmem:[%s6] sm:$0x1]
    %v189 = vperm.slane %v187, 0
    %191 = vmatpush.msra.mxu0 %v186
    %192 = vmatpush.msra.mxu0 %v185
    %193 = vmatpush.msra.mxu0 %v184
    %194 = vmatpush.msra.mxu0 %v183
    %195 = vmatpush.msra.mxu0 %v182
    %196 = vmatpush.msra.mxu0 %v181
    %197 = vmatpush.msra.mxu0 %v180
    %198 = vmatpush.msra.mxu0 %v179
    %199 = vmatpush.msra.mxu0 %v178
    %200 = vmatpush.msra.mxu0 %v177
    %201 = vmatpush.msra.mxu0 %v176
    %202 = vmatpush.msra.mxu0 %v175
    %203 = vmatpush.msra.mxu0 %v174
    %204 = vmatpush.msra.mxu0 %v173
    %205 = vmatpush.msra.mxu0 %v172
    %206 = vmatpush.msra.mxu0 %v171
    %207 = vmatmul.f32.gmra.mxu0 %v170
    %v208 = vpop.f32.mrf.mxu0
    %v209 = vadd.f32 %v189, %v208
    %210 = vdwg.mxu0
    %v211 = vmax.f32 %v209, 0.0
    %212 = vst [vmem:[#allocation10] sm:$0xff] %v211
    // Predicated region
    $region46: #{tpu_custom_call.1} parent=1 // pred_check
      _
    $region47: #{tpu_custom_call.1} parent=1 // pred_check_branch
      %214 = sbr.rel (0) target = $region49
    $region48: #{tpu_custom_call.1} parent=1 // pred_region
      %216 = vsyncadd [#allocation4], 0
      %s218 = sshll.u32 [#allocation10], 4
      %s219 = int_to_ptr.vmem [resolvable:$true] %s218
      %s220 = sshll.u32 %s7, 4
      %s221 = int_to_ptr.hbm [resolvable:$true] %s220
      %223 = dma.vmem_to_hbm [thread:$0]  %s219, 128, %s221, [#allocation4]
    $region49: #{tpu_custom_call.1} parent=1 // pred_fallthru
      _
    // Predicated region
    $region50: #{tpu_custom_call.1} parent=1 // pred_check
      _
    $region51: #{tpu_custom_call.1} parent=1 // pred_check_branch
      %225 = sbr.rel (0) target = $region53
    $region52: #{tpu_custom_call.1} parent=1 // pred_region
      %227 = dma.done [#allocation4], 128
    $region53: #{tpu_custom_call.1} parent=1 // pred_fallthru
      _
    %228 = vsyncpa [#allocation3], 1
    %229 = vsyncpa [#allocation6], 1
    %230 = vsyncpa [#allocation9], 1
    %231 = vsyncpa [#allocation4], 1

</llo_original>
